<compile_context>
chip_gen: v5e
topology: v5e:2x2
jax: 0.10.0
libtpu: 0.0.40
codegen_flags: <defaults>
</compile_context>

<pallas_src>
import functools
import math

import jax
import jax.numpy as jnp
from jax import lax
from jax.experimental import pallas as pl
from jax.experimental.pallas import tpu as pltpu

_LANE = 128     # vreg lane width (last dim)
_SUBLANE = 8    # vreg sublane count (second-to-last dim)


def _round_up(x, m):
    return (x + m - 1) // m * m


def _pad2(a, rows, cols):
    r, c = a.shape
    return jnp.pad(a, ((0, rows - r), (0, cols - c)))


def _gelu_tanh(x):
    # tanh-approximate GELU: the transcendental goes to the EUP (free VLIW slot)
    # instead of lowering erf as a long VALU polynomial.
    c = math.sqrt(2.0 / math.pi)
    return 0.5 * x * (1.0 + jnp.tanh(c * (x + 0.044715 * (x * x * x))))


def _gelu_erf(x):
    # Exact (erf-based) GELU, matching torch.nn.GELU() default.
    return 0.5 * x * (1.0 + lax.erf(x * (1.0 / math.sqrt(2.0))))


def mlpnet_kernel(x_ref, w1_ref, b1_ref, w2_ref, b2_ref, w3_ref, b3_ref, o_ref,
                  *, approximate_gelu=True):
    gelu = _gelu_tanh if approximate_gelu else _gelu_erf

    x = x_ref[...]                      # (tm, Dp) f32 activation tile

    # fc1 -> dropout1 (identity, eval) -> GELU -> skip connection
    w1 = w1_ref[...]
    h = jnp.dot(x.astype(w1.dtype), w1, preferred_element_type=jnp.float32)
    h = gelu(h + b1_ref[...]) + x

    # fc2 -> dropout2 (identity, eval) -> GELU -> skip connection
    w2 = w2_ref[...]
    z = jnp.dot(h.astype(w2.dtype), w2, preferred_element_type=jnp.float32)
    z = gelu(z + b2_ref[...]) + h

    # final projection to (padded) num_classes; lane-dense 128-multiple store.
    w3 = w3_ref[...]
    out = jnp.dot(z.astype(w3.dtype), w3, preferred_element_type=jnp.float32)
    o_ref[...] = (out + b3_ref[...]).astype(o_ref.dtype)


def mlpnet_forward(x, params, *, tm=256, weight_dtype=jnp.float32,
                   approximate_gelu=True):
    """x: (B, emb_dim) float32. params: dict of (in, out) weights / (1, out) biases.

    tm:            batch tile (rows per grid step); rounded to a multiple of 8.
    weight_dtype:  jnp.float32 or jnp.bfloat16 (bf16 recommended on v6e/v7x for
                   2x MXU rate and half the resident-weight VMEM; accumulation
                   stays f32 via preferred_element_type).
    """
    B, D = x.shape
    C = params["w3"].shape[1]

    # Pad feature dims to full 128-lane multiples (lane-dense loads/stores, full
    # MXU columns); pad batch to a multiple of the batch tile.
    Dp = _round_up(D, _LANE)
    Cp = _round_up(C, _LANE)
    tm = min(_round_up(B, _SUBLANE), _round_up(tm, _SUBLANE))
    Bp = _round_up(B, tm)

    f32 = jnp.float32
    xp = _pad2(x.astype(f32), Bp, Dp)
    w1 = _pad2(params["w1"], Dp, Dp).astype(weight_dtype)
    w2 = _pad2(params["w2"], Dp, Dp).astype(weight_dtype)
    w3 = _pad2(params["w3"], Dp, Cp).astype(weight_dtype)
    b1 = _pad2(params["b1"], 1, Dp).astype(f32)
    b2 = _pad2(params["b2"], 1, Dp).astype(f32)
    b3 = _pad2(params["b3"], 1, Cp).astype(f32)

    # Explicit scoped-VMEM budget: resident weights/biases + double-buffered
    # streamed x/out tiles, with headroom. (At large D on v7x's 64 MiB VMEM use
    # weight_dtype=bf16 or add a K-tiled accumulator instead of raising this.)
    w_item = jnp.dtype(weight_dtype).itemsize
    f_item = jnp.dtype(f32).itemsize
    resident = (2 * Dp * Dp + Dp * Cp) * w_item + (2 * Dp + Cp) * f_item
    streamed = tm * (Dp + Cp) * f_item
    vmem_limit = int(2 * (resident + streamed) * 1.25) + (2 << 20)
    vmem_limit = max(vmem_limit, 4 << 20)

    grid = (Bp // tm,)

    out_padded = pl.pallas_call(
        functools.partial(mlpnet_kernel, approximate_gelu=approximate_gelu),
        out_shape=jax.ShapeDtypeStruct((Bp, Cp), x.dtype),
        grid_spec=pltpu.PrefetchScalarGridSpec(
            num_scalar_prefetch=0,
            grid=grid,
            in_specs=[
                # x: streamed over the batch grid axis.
                pl.BlockSpec((tm, Dp), lambda i: (i, 0)),
                # weights / biases: constant index_map -> VMEM-resident, no
                # re-DMA across batch tiles.
                pl.BlockSpec((Dp, Dp), lambda i: (0, 0)),   # w1
                pl.BlockSpec((1, Dp), lambda i: (0, 0)),    # b1
                pl.BlockSpec((Dp, Dp), lambda i: (0, 0)),   # w2
                pl.BlockSpec((1, Dp), lambda i: (0, 0)),    # b2
                pl.BlockSpec((Dp, Cp), lambda i: (0, 0)),   # w3
                pl.BlockSpec((1, Cp), lambda i: (0, 0)),    # b3
            ],
            out_specs=pl.BlockSpec((tm, Cp), lambda i: (i, 0)),
        ),
        compiler_params=pltpu.CompilerParams(
            dimension_semantics=("parallel",),   # batch tiles are independent
            vmem_limit_bytes=vmem_limit,
        ),
    )(xp, w1, b1, w2, b2, w3, b3)

    return out_padded[:B, :C]


def init_params(key, emb_dim, num_classes):
    """Deterministic init mimicking nn.Linear default (uniform +-1/sqrt(fan_in)).

    Weights are stored already transposed to (in, out) for the kernel.
    """
    ks = jax.random.split(key, 6)

    def lin(kw, kb, fan_in, fan_out):
        bound = 1.0 / math.sqrt(fan_in)
        w = jax.random.uniform(kw, (fan_in, fan_out), jnp.float32, -bound, bound)
        b = jax.random.uniform(kb, (1, fan_out), jnp.float32, -bound, bound)
        return w, b

    w1, b1 = lin(ks[0], ks[1], emb_dim, emb_dim)
    w2, b2 = lin(ks[2], ks[3], emb_dim, emb_dim)
    w3, b3 = lin(ks[4], ks[5], emb_dim, num_classes)
    return {"w1": w1, "b1": b1, "w2": w2, "b2": b2, "w3": w3, "b3": b3}


def mlpnet_reference(x, p, approximate_gelu=True):
    # Pure-JAX reference for correctness check.
    gelu = _gelu_tanh if approximate_gelu else _gelu_erf
    h = gelu(x @ p["w1"] + p["b1"]) + x
    z = gelu(h @ p["w2"] + p["b2"]) + h
    return z @ p["w3"] + p["b3"]


if __name__ == "__main__":
    key = jax.random.PRNGKey(0)
    k_x, k_p = jax.random.split(key)

    batch, emb_dim, num_classes = 64, 32, 8
    x = jax.random.normal(k_x, (batch, emb_dim), dtype=jnp.float32)
    params = init_params(k_p, emb_dim, num_classes)

    # tm=16 -> 4 batch tiles: exercises the pipelined, parallel batch grid even
    # at this small demo size (for real sizes leave tm at its 256 default).
    out = mlpnet_forward(x, params, tm=16)
    out = jax.block_until_ready(out)

    assert out.shape == (batch, num_classes)

    # Same-math reference (tanh GELU): tight tolerance.
    ref_tanh = mlpnet_reference(x, params, approximate_gelu=True)
    assert jnp.allclose(out, ref_tanh, atol=1e-3, rtol=1e-3), "mismatch vs tanh reference"

    # torch.nn.GELU()-default (erf) reference: loose tolerance, documents the
    # ~1e-3-level deviation introduced by the tanh approximation.
    ref_erf = mlpnet_reference(x, params, approximate_gelu=False)
    assert jnp.allclose(out, ref_erf, atol=3e-2, rtol=3e-2), "mismatch vs erf reference"

    print("KERNEL_OK")
</pallas_src>

<mosaic_0001>
module attributes {stable_mosaic.version = 11 : i64} {
  func.func @mlpnet_kernel(%arg0: i32, %arg1: memref<16x128xf32, #tpu.memory_space<vmem>>, %arg2: memref<128x128xf32, #tpu.memory_space<vmem>>, %arg3: memref<1x128xf32, #tpu.memory_space<vmem>>, %arg4: memref<128x128xf32, #tpu.memory_space<vmem>>, %arg5: memref<1x128xf32, #tpu.memory_space<vmem>>, %arg6: memref<128x128xf32, #tpu.memory_space<vmem>>, %arg7: memref<1x128xf32, #tpu.memory_space<vmem>>, %arg8: memref<16x128xf32, #tpu.memory_space<vmem>>) attributes {dimension_semantics = [#tpu.dimension_semantics<parallel>], iteration_bounds = array<i64: 4>, scalar_prefetch = 0 : i64, scratch_operands = 0 : i64, tpu.core_type = #tpu.core_type<tc>, window_params = [{transform_indices = @transform_0, window_bounds = array<i64: 16, 128>}, {pipeline_mode = #tpu.pipeline_mode<synchronous>, transform_indices = @transform_1, window_bounds = array<i64: 128, 128>}, {pipeline_mode = #tpu.pipeline_mode<synchronous>, transform_indices = @transform_2, window_bounds = array<i64: 1, 128>}, {pipeline_mode = #tpu.pipeline_mode<synchronous>, transform_indices = @transform_3, window_bounds = array<i64: 128, 128>}, {pipeline_mode = #tpu.pipeline_mode<synchronous>, transform_indices = @transform_4, window_bounds = array<i64: 1, 128>}, {pipeline_mode = #tpu.pipeline_mode<synchronous>, transform_indices = @transform_5, window_bounds = array<i64: 128, 128>}, {pipeline_mode = #tpu.pipeline_mode<synchronous>, transform_indices = @transform_6, window_bounds = array<i64: 1, 128>}, {transform_indices = @transform_7, window_bounds = array<i64: 16, 128>}]} {
    %c0 = arith.constant 0 : index
    %c0_0 = arith.constant 0 : index
    %0 = vector.load %arg1[%c0, %c0_0] : memref<16x128xf32, #tpu.memory_space<vmem>>, vector<16x128xf32>
    %c0_1 = arith.constant 0 : index
    %c0_2 = arith.constant 0 : index
    %1 = vector.load %arg2[%c0_1, %c0_2] : memref<128x128xf32, #tpu.memory_space<vmem>>, vector<128x128xf32>
    %cst = arith.constant dense<0.000000e+00> : vector<16x128xf32>
    %2 = tpu.matmul %0, %1, %cst {dimension_numbers = #tpu.dot_dimension_numbers<[1], [0], [0], [1], [0, 0, 1, 1], [], []>} : vector<16x128xf32>, vector<128x128xf32>, vector<16x128xf32> -> vector<16x128xf32>
    %c0_3 = arith.constant 0 : index
    %c0_4 = arith.constant 0 : index
    %3 = vector.load %arg3[%c0_3, %c0_4] : memref<1x128xf32, #tpu.memory_space<vmem>>, vector<1x128xf32>
    %4 = vector.broadcast %3 : vector<1x128xf32> to vector<16x128xf32>
    %5 = arith.addf %2, %4 : vector<16x128xf32>
    %cst_5 = arith.constant 5.000000e-01 : f32
    %6 = vector.broadcast %cst_5 : f32 to vector<16x128xf32>
    %7 = arith.mulf %6, %5 : vector<16x128xf32>
    %8 = arith.mulf %5, %5 : vector<16x128xf32>
    %9 = arith.mulf %8, %5 : vector<16x128xf32>
    %cst_6 = arith.constant 4.471500e-02 : f32
    %10 = vector.broadcast %cst_6 : f32 to vector<16x128xf32>
    %11 = arith.mulf %10, %9 : vector<16x128xf32>
    %12 = arith.addf %5, %11 : vector<16x128xf32>
    %cst_7 = arith.constant 0.797884583 : f32
    %13 = vector.broadcast %cst_7 : f32 to vector<16x128xf32>
    %14 = arith.mulf %13, %12 : vector<16x128xf32>
    %15 = math.tanh %14 : vector<16x128xf32>
    %cst_8 = arith.constant 1.000000e+00 : f32
    %16 = vector.broadcast %cst_8 : f32 to vector<16x128xf32>
    %17 = arith.addf %16, %15 : vector<16x128xf32>
    %18 = arith.mulf %7, %17 : vector<16x128xf32>
    %19 = arith.addf %18, %0 : vector<16x128xf32>
    %c0_9 = arith.constant 0 : index
    %c0_10 = arith.constant 0 : index
    %20 = vector.load %arg4[%c0_9, %c0_10] : memref<128x128xf32, #tpu.memory_space<vmem>>, vector<128x128xf32>
    %cst_11 = arith.constant dense<0.000000e+00> : vector<16x128xf32>
    %21 = tpu.matmul %19, %20, %cst_11 {dimension_numbers = #tpu.dot_dimension_numbers<[1], [0], [0], [1], [0, 0, 1, 1], [], []>} : vector<16x128xf32>, vector<128x128xf32>, vector<16x128xf32> -> vector<16x128xf32>
    %c0_12 = arith.constant 0 : index
    %c0_13 = arith.constant 0 : index
    %22 = vector.load %arg5[%c0_12, %c0_13] : memref<1x128xf32, #tpu.memory_space<vmem>>, vector<1x128xf32>
    %23 = vector.broadcast %22 : vector<1x128xf32> to vector<16x128xf32>
    %24 = arith.addf %21, %23 : vector<16x128xf32>
    %cst_14 = arith.constant 5.000000e-01 : f32
    %25 = vector.broadcast %cst_14 : f32 to vector<16x128xf32>
    %26 = arith.mulf %25, %24 : vector<16x128xf32>
    %27 = arith.mulf %24, %24 : vector<16x128xf32>
    %28 = arith.mulf %27, %24 : vector<16x128xf32>
    %cst_15 = arith.constant 4.471500e-02 : f32
    %29 = vector.broadcast %cst_15 : f32 to vector<16x128xf32>
    %30 = arith.mulf %29, %28 : vector<16x128xf32>
    %31 = arith.addf %24, %30 : vector<16x128xf32>
    %cst_16 = arith.constant 0.797884583 : f32
    %32 = vector.broadcast %cst_16 : f32 to vector<16x128xf32>
    %33 = arith.mulf %32, %31 : vector<16x128xf32>
    %34 = math.tanh %33 : vector<16x128xf32>
    %cst_17 = arith.constant 1.000000e+00 : f32
    %35 = vector.broadcast %cst_17 : f32 to vector<16x128xf32>
    %36 = arith.addf %35, %34 : vector<16x128xf32>
    %37 = arith.mulf %26, %36 : vector<16x128xf32>
    %38 = arith.addf %37, %19 : vector<16x128xf32>
    %c0_18 = arith.constant 0 : index
    %c0_19 = arith.constant 0 : index
    %39 = vector.load %arg6[%c0_18, %c0_19] : memref<128x128xf32, #tpu.memory_space<vmem>>, vector<128x128xf32>
    %cst_20 = arith.constant dense<0.000000e+00> : vector<16x128xf32>
    %40 = tpu.matmul %38, %39, %cst_20 {dimension_numbers = #tpu.dot_dimension_numbers<[1], [0], [0], [1], [0, 0, 1, 1], [], []>} : vector<16x128xf32>, vector<128x128xf32>, vector<16x128xf32> -> vector<16x128xf32>
    %c0_21 = arith.constant 0 : index
    %c0_22 = arith.constant 0 : index
    %41 = vector.load %arg7[%c0_21, %c0_22] : memref<1x128xf32, #tpu.memory_space<vmem>>, vector<1x128xf32>
    %42 = vector.broadcast %41 : vector<1x128xf32> to vector<16x128xf32>
    %43 = arith.addf %40, %42 : vector<16x128xf32>
    %c0_23 = arith.constant 0 : index
    %c0_24 = arith.constant 0 : index
    %44 = vector.load %arg8[%c0_23, %c0_24] : memref<16x128xf32, #tpu.memory_space<vmem>>, vector<16x128xf32>
    tpu.vector_store %arg8[%c0_23, %c0_24], %43 {strides = array<i32>} : memref<16x128xf32, #tpu.memory_space<vmem>>, vector<16x128xf32>,
    return
  }
  func.func @transform_0(%arg0: i32) -> (i32, i32) {
    %c0_i32 = arith.constant 0 : i32
    %c0_i32_0 = arith.constant 0 : i32
    return %arg0, %c0_i32 : i32, i32
  }
  func.func @transform_1(%arg0: i32) -> (i32, i32) {
    %c0_i32 = arith.constant 0 : i32
    %c0_i32_0 = arith.constant 0 : i32
    %c0_i32_1 = arith.constant 0 : i32
    return %c0_i32, %c0_i32_0 : i32, i32
  }
  func.func @transform_2(%arg0: i32) -> (i32, i32) {
    %c0_i32 = arith.constant 0 : i32
    %c0_i32_0 = arith.constant 0 : i32
    %c0_i32_1 = arith.constant 0 : i32
    return %c0_i32, %c0_i32_0 : i32, i32
  }
  func.func @transform_3(%arg0: i32) -> (i32, i32) {
    %c0_i32 = arith.constant 0 : i32
    %c0_i32_0 = arith.constant 0 : i32
    %c0_i32_1 = arith.constant 0 : i32
    return %c0_i32, %c0_i32_0 : i32, i32
  }
  func.func @transform_4(%arg0: i32) -> (i32, i32) {
    %c0_i32 = arith.constant 0 : i32
    %c0_i32_0 = arith.constant 0 : i32
    %c0_i32_1 = arith.constant 0 : i32
    return %c0_i32, %c0_i32_0 : i32, i32
  }
  func.func @transform_5(%arg0: i32) -> (i32, i32) {
    %c0_i32 = arith.constant 0 : i32
    %c0_i32_0 = arith.constant 0 : i32
    %c0_i32_1 = arith.constant 0 : i32
    return %c0_i32, %c0_i32_0 : i32, i32
  }
  func.func @transform_6(%arg0: i32) -> (i32, i32) {
    %c0_i32 = arith.constant 0 : i32
    %c0_i32_0 = arith.constant 0 : i32
    %c0_i32_1 = arith.constant 0 : i32
    return %c0_i32, %c0_i32_0 : i32, i32
  }
  func.func @transform_7(%arg0: i32) -> (i32, i32) {
    %c0_i32 = arith.constant 0 : i32
    %c0_i32_0 = arith.constant 0 : i32
    return %arg0, %c0_i32 : i32, i32
  }
}

</mosaic_0001>

<llo_original>
// kernel: tpu_custom_call.1
$region0: #{tpu_custom_call.1}
  #allocation0 [shape = 'u32[]', space=smem, size = 0x4, offset = 0x4, fixed_abs, tag = 'smem constant byte address 0x4 - core index']
  #allocation1 [shape = 'u32[72,128]{1,0:T(1,128)}', space=vmem, size = 0x9000, scoped, tag = 'internal scratch']
  %s0 = inlined_call_operand.hbm [shape: f32[64,128], index: 0, kind: input, shape index: {}]
  %s1 = inlined_call_operand.hbm [shape: f32[128,128], index: 1, kind: input, shape index: {}]
  %s2 = inlined_call_operand.vmem [shape: f32[1,128], index: 2, kind: input, shape index: {}]
  %s3 = inlined_call_operand.hbm [shape: f32[128,128], index: 3, kind: input, shape index: {}]
  %s4 = inlined_call_operand.vmem [shape: f32[1,128], index: 4, kind: input, shape index: {}]
  %s5 = inlined_call_operand.hbm [shape: f32[128,128], index: 5, kind: input, shape index: {}]
  %s6 = inlined_call_operand.vmem [shape: f32[1,128], index: 6, kind: input, shape index: {}]
  %s7 = inlined_call_operand.hbm [shape: f32[64,128], index: 7, kind: output, shape index: {}]
  %s8 = sld [smem:[#allocation0]]
  $region77: #{tpu_custom_call.1} parent=0
    _
  %s10 = ssub.s32 1, %s8
  %s11 = scalar_select 0, %s10, %s8
  $region1: #{tpu_custom_call.1} parent=0
    #allocation2 [shape = 'u8[16384]{0}', space=vmem, size = 0x4000, scoped, tag = 'input window, operand 0']
    #allocation3 [shape = 's32[2]{0}', space=sflag, size = 0x8, scoped, tag = 'scoped memory for tpu_custom_call.1']
    #allocation4 [shape = 's32[2]{0}', space=sflag, size = 0x8, scoped, tag = 'scoped memory for tpu_custom_call.1']
    #allocation5 [shape = 'u8[65536]{0}', space=vmem, size = 0x10000, scoped, tag = 'input window, operand 1, single buffered']
    #allocation6 [shape = 's32[1]{0}', space=sflag, size = 0x4, scoped, tag = 'scoped memory for tpu_custom_call.1']
    #allocation7 [shape = 'u8[65536]{0}', space=vmem, size = 0x10000, scoped, tag = 'input window, operand 3, single buffered']
    #allocation8 [shape = 'u8[65536]{0}', space=vmem, size = 0x10000, scoped, tag = 'input window, operand 5, single buffered']
    #allocation9 [shape = 's32[1]{0}', space=sflag, size = 0x4, scoped, tag = 'scoped memory for tpu_custom_call.1']
    #allocation10 [shape = 'u8[16384]{0}', space=vmem, size = 0x4000, scoped, tag = 'output window, operand 0']
    %12 = vsyncpa [#allocation3], 0
    %s13 = scalar_lea.sflag [#allocation3], 1
    %14 = vsyncpa %s13, 0
    %15 = vsyncpa [#allocation6], 0
    %16 = vsyncpa [#allocation9], 0
    %17 = vsyncpa [#allocation4], 0
    %s18 = scalar_lea.sflag [#allocation4], 1
    %19 = vsyncpa %s18, 0
    loop: start=0, step=1, limit=6
    $region2: #{tpu_custom_call.1} parent=1 // loop_pre_header
      _
    $region3: #{tpu_custom_call.1} parent=1 // loop_header
      %s21 = sphi 0, %s25
      %p22 = scmp.ge.s32.totalorder %s21, 6
      %s31 = sphi 0, %s33
      %s34 = sphi 0, %s31
      %s35 = sphi 0, %s34
      %s51 = sphi 0, %s35
      %s55 = sphi 0, %s55
      %s57 = sphi 0, %s55
      %s58 = sphi 0, %s57
      %s72 = sphi 0, %s58
      %s76 = sphi 0, %s76
      %s78 = sphi 0, %s76
      %s79 = sphi 0, %s78
      %s93 = sphi 0, %s79
      %s97 = sphi 0, %s97
      %s99 = sphi 0, %s97
      %s100 = sphi 0, %s99
      %s114 = sphi 0, %s100
      %s118 = sphi 0, %s118
      %s120 = sphi 0, %s118
      %s121 = sphi 0, %s120
      %s135 = sphi 0, %s121
      %s139 = sphi 0, %s139
      %s141 = sphi 0, %s139
      %s142 = sphi 0, %s141
      %s156 = sphi 0, %s142
      %s160 = sphi 0, %s160
      %s162 = sphi 0, %s160
      %s163 = sphi 0, %s162
      %s177 = sphi 0, %s163
      %s183 = sphi 0, %s185
      %s186 = sphi 0, %s183
      %s187 = sphi 0, %s186
      %s203 = sphi 0, %s187
    $region4: #{tpu_custom_call.1} parent=1 // loop_header_branch
      %24 = sbr.rel (%p22) target = $region8
    $region5: #{tpu_custom_call.1} parent=1 // loop_body
      %s26 = ssub.s32 %s21, 1
      %s27 = ssub.s32 %s21, 2
      %s28 = sadd.s32 %s21, 1
      %s29 = ssub.s32 %s21, %s28
      %p30 = scmp.eq.s32.totalorder %s29, 0
      %s32 = sadd.s32 %s31, 1
      %s33 = scalar_select %p30, %s31, %s32
      %p36 = pneg %p30
      %p37 = scmp.eq.s32.totalorder %s21, 3
      %p38 = por %p36, %p37
      %p39 = scmp.ne.s32.totalorder %s31, %s34
      %p40 = scmp.eq.s32.totalorder %s21, 0
      %p41 = por %p39, %p40
      %p42 = scmp.ne.s32.totalorder %s31, %s34
      %p43 = scmp.eq.s32.totalorder %s26, 3
      %p44 = por %p42, %p43
      %p45 = scmp.ne.s32.totalorder %s34, %s35
      %p46 = scmp.eq.s32.totalorder %s26, 0
      %p47 = por %p45, %p46
      %p48 = scmp.ne.s32.totalorder %s34, %s35
      %p49 = scmp.eq.s32.totalorder %s27, 3
      %p50 = por %p48, %p49
      %p52 = scmp.ne.s32.totalorder %s35, %s51
      %p53 = scmp.eq.s32.totalorder %s27, 0
      %p54 = por %p52, %p53
      %s56 = sadd.s32 %s55, 1
      %p59 = scmp.eq.s32.totalorder %s21, 3
      %p60 = scmp.ne.s32.totalorder %s55, %s57
      %p61 = scmp.eq.s32.totalorder %s21, 0
      %p62 = por %p60, %p61
      %p63 = scmp.ne.s32.totalorder %s55, %s57
      %p64 = scmp.eq.s32.totalorder %s26, 3
      %p65 = por %p63, %p64
      %p66 = scmp.ne.s32.totalorder %s57, %s58
      %p67 = scmp.eq.s32.totalorder %s26, 0
      %p68 = por %p66, %p67
      %p69 = scmp.ne.s32.totalorder %s57, %s58
      %p70 = scmp.eq.s32.totalorder %s27, 3
      %p71 = por %p69, %p70
      %p73 = scmp.ne.s32.totalorder %s58, %s72
      %p74 = scmp.eq.s32.totalorder %s27, 0
      %p75 = por %p73, %p74
      %s77 = sadd.s32 %s76, 1
      %p80 = scmp.eq.s32.totalorder %s21, 3
      %p81 = scmp.ne.s32.totalorder %s76, %s78
      %p82 = scmp.eq.s32.totalorder %s21, 0
      %p83 = por %p81, %p82
      %p84 = scmp.ne.s32.totalorder %s76, %s78
      %p85 = scmp.eq.s32.totalorder %s26, 3
      %p86 = por %p84, %p85
      %p87 = scmp.ne.s32.totalorder %s78, %s79
      %p88 = scmp.eq.s32.totalorder %s26, 0
      %p89 = por %p87, %p88
      %p90 = scmp.ne.s32.totalorder %s78, %s79
      %p91 = scmp.eq.s32.totalorder %s27, 3
      %p92 = por %p90, %p91
      %p94 = scmp.ne.s32.totalorder %s79, %s93
      %p95 = scmp.eq.s32.totalorder %s27, 0
      %p96 = por %p94, %p95
      %s98 = sadd.s32 %s97, 1
      %p101 = scmp.eq.s32.totalorder %s21, 3
      %p102 = scmp.ne.s32.totalorder %s97, %s99
      %p103 = scmp.eq.s32.totalorder %s21, 0
      %p104 = por %p102, %p103
      %p105 = scmp.ne.s32.totalorder %s97, %s99
      %p106 = scmp.eq.s32.totalorder %s26, 3
      %p107 = por %p105, %p106
      %p108 = scmp.ne.s32.totalorder %s99, %s100
      %p109 = scmp.eq.s32.totalorder %s26, 0
      %p110 = por %p108, %p109
      %p111 = scmp.ne.s32.totalorder %s99, %s100
      %p112 = scmp.eq.s32.totalorder %s27, 3
      %p113 = por %p111, %p112
      %p115 = scmp.ne.s32.totalorder %s100, %s114
      %p116 = scmp.eq.s32.totalorder %s27, 0
      %p117 = por %p115, %p116
      %s119 = sadd.s32 %s118, 1
      %p122 = scmp.eq.s32.totalorder %s21, 3
      %p123 = scmp.ne.s32.totalorder %s118, %s120
      %p124 = scmp.eq.s32.totalorder %s21, 0
      %p125 = por %p123, %p124
      %p126 = scmp.ne.s32.totalorder %s118, %s120
      %p127 = scmp.eq.s32.totalorder %s26, 3
      %p128 = por %p126, %p127
      %p129 = scmp.ne.s32.totalorder %s120, %s121
      %p130 = scmp.eq.s32.totalorder %s26, 0
      %p131 = por %p129, %p130
      %p132 = scmp.ne.s32.totalorder %s120, %s121
      %p133 = scmp.eq.s32.totalorder %s27, 3
      %p134 = por %p132, %p133
      %p136 = scmp.ne.s32.totalorder %s121, %s135
      %p137 = scmp.eq.s32.totalorder %s27, 0
      %p138 = por %p136, %p137
      %s140 = sadd.s32 %s139, 1
      %p143 = scmp.eq.s32.totalorder %s21, 3
      %p144 = scmp.ne.s32.totalorder %s139, %s141
      %p145 = scmp.eq.s32.totalorder %s21, 0
      %p146 = por %p144, %p145
      %p147 = scmp.ne.s32.totalorder %s139, %s141
      %p148 = scmp.eq.s32.totalorder %s26, 3
      %p149 = por %p147, %p148
      %p150 = scmp.ne.s32.totalorder %s141, %s142
      %p151 = scmp.eq.s32.totalorder %s26, 0
      %p152 = por %p150, %p151
      %p153 = scmp.ne.s32.totalorder %s141, %s142
      %p154 = scmp.eq.s32.totalorder %s27, 3
      %p155 = por %p153, %p154
      %p157 = scmp.ne.s32.totalorder %s142, %s156
      %p158 = scmp.eq.s32.totalorder %s27, 0
      %p159 = por %p157, %p158
      %s161 = sadd.s32 %s160, 1
      %p164 = scmp.eq.s32.totalorder %s21, 3
      %p165 = scmp.ne.s32.totalorder %s160, %s162
      %p166 = scmp.eq.s32.totalorder %s21, 0
      %p167 = por %p165, %p166
      %p168 = scmp.ne.s32.totalorder %s160, %s162
      %p169 = scmp.eq.s32.totalorder %s26, 3
      %p170 = por %p168, %p169
      %p171 = scmp.ne.s32.totalorder %s162, %s163
      %p172 = scmp.eq.s32.totalorder %s26, 0
      %p173 = por %p171, %p172
      %p174 = scmp.ne.s32.totalorder %s162, %s163
      %p175 = scmp.eq.s32.totalorder %s27, 3
      %p176 = por %p174, %p175
      %p178 = scmp.ne.s32.totalorder %s163, %s177
      %p179 = scmp.eq.s32.totalorder %s27, 0
      %p180 = por %p178, %p179
      %s181 = ssub.s32 %s21, %s28
      %p182 = scmp.eq.s32.totalorder %s181, 0
      %s184 = sadd.s32 %s183, 1
      %s185 = scalar_select %p182, %s183, %s184
      %p188 = pneg %p182
      %p189 = scmp.eq.s32.totalorder %s21, 3
      %p190 = por %p188, %p189
      %p191 = scmp.ne.s32.totalorder %s183, %s186
      %p192 = scmp.eq.s32.totalorder %s21, 0
      %p193 = por %p191, %p192
      %p194 = scmp.ne.s32.totalorder %s183, %s186
      %p195 = scmp.eq.s32.totalorder %s26, 3
      %p196 = por %p194, %p195
      %p197 = scmp.ne.s32.totalorder %s186, %s187
      %p198 = scmp.eq.s32.totalorder %s26, 0
      %p199 = por %p197, %p198
      %p200 = scmp.ne.s32.totalorder %s186, %s187
      %p201 = scmp.eq.s32.totalorder %s27, 3
      %p202 = por %p200, %p201
      %p204 = scmp.ne.s32.totalorder %s187, %s203
      %p205 = scmp.eq.s32.totalorder %s27, 0
      %p206 = por %p204, %p205
      %p207 = scmp.le.s32.totalorder 1, %s21
      %p208 = scmp.lt.s32.totalorder %s21, 5
      %p209 = pnand %p207, %p208
      %p210 = pneg %p209
      // Predicated region
      $region9: #{tpu_custom_call.1} parent=5 // pred_check
        _
      $region10: #{tpu_custom_call.1} parent=5 // pred_check_branch
        %212 = sbr.rel (%p209) target = $region12
      $region11: #{tpu_custom_call.1} parent=5 // pred_region
        %s213 = ssub.s32 %s21, 1
        // Predicated region
        $region13: #{tpu_custom_call.1} parent=11 // pred_check
          %p214 = pneg %p68
        $region14: #{tpu_custom_call.1} parent=11 // pred_check_branch
          %216 = sbr.rel (%p214) target = $region16
        $region15: #{tpu_custom_call.1} parent=11 // pred_region
          %218 = vsyncadd [#allocation6], 0
          %s219 = sshll.u32 %s1, 4
          %s220 = int_to_ptr.hbm [resolvable:$true] %s219
          %s221 = sshll.u32 [#allocation5], 4
          %s222 = int_to_ptr.vmem [resolvable:$true] %s221
          %227 = dma.hbm_to_vmem [thread:$0]  %s220, 2048, %s222, [#allocation6], 128, 128, 8
        $region16: #{tpu_custom_call.1} parent=11 // pred_fallthru
          _
        // Predicated region
        $region17: #{tpu_custom_call.1} parent=11 // pred_check
          %p228 = pneg %p89
        $region18: #{tpu_custom_call.1} parent=11 // pred_check_branch
          %230 = sbr.rel (%p228) target = $region20
        $region19: #{tpu_custom_call.1} parent=11 // pred_region
          _
        $region20: #{tpu_custom_call.1} parent=11 // pred_fallthru
          _
        // Predicated region
        $region21: #{tpu_custom_call.1} parent=11 // pred_check
          %p231 = pneg %p110
        $region22: #{tpu_custom_call.1} parent=11 // pred_check_branch
          %233 = sbr.rel (%p231) target = $region24
        $region23: #{tpu_custom_call.1} parent=11 // pred_region
          %235 = vsyncadd [#allocation6], 0
          %s236 = sshll.u32 %s3, 4
          %s237 = int_to_ptr.hbm [resolvable:$true] %s236
          %s238 = sshll.u32 [#allocation7], 4
          %s239 = int_to_ptr.vmem [resolvable:$true] %s238
          %244 = dma.hbm_to_vmem [thread:$0]  %s237, 2048, %s239, [#allocation6], 128, 128, 8
        $region24: #{tpu_custom_call.1} parent=11 // pred_fallthru
          _
        // Predicated region
        $region25: #{tpu_custom_call.1} parent=11 // pred_check
          %p245 = pneg %p131
        $region26: #{tpu_custom_call.1} parent=11 // pred_check_branch
          %247 = sbr.rel (%p245) target = $region28
        $region27: #{tpu_custom_call.1} parent=11 // pred_region
          _
        $region28: #{tpu_custom_call.1} parent=11 // pred_fallthru
          _
        // Predicated region
        $region29: #{tpu_custom_call.1} parent=11 // pred_check
          %p248 = pneg %p152
        $region30: #{tpu_custom_call.1} parent=11 // pred_check_branch
          %250 = sbr.rel (%p248) target = $region32
        $region31: #{tpu_custom_call.1} parent=11 // pred_region
          %252 = vsyncadd [#allocation9], 0
          %s253 = sshll.u32 %s5, 4
          %s254 = int_to_ptr.hbm [resolvable:$true] %s253
          %s255 = sshll.u32 [#allocation8], 4
          %s256 = int_to_ptr.vmem [resolvable:$true] %s255
          %261 = dma.hbm_to_vmem [thread:$0]  %s254, 2048, %s256, [#allocation9], 128, 128, 8
        $region32: #{tpu_custom_call.1} parent=11 // pred_fallthru
          _
        // Predicated region
        $region33: #{tpu_custom_call.1} parent=11 // pred_check
          %p262 = pneg %p173
        $region34: #{tpu_custom_call.1} parent=11 // pred_check_branch
          %264 = sbr.rel (%p262) target = $region36
        $region35: #{tpu_custom_call.1} parent=11 // pred_region
          _
        $region36: #{tpu_custom_call.1} parent=11 // pred_fallthru
          _
      $region12: #{tpu_custom_call.1} parent=5 // pred_fallthru
        _
      %p265 = scmp.lt.s32.totalorder %s21, 4
      // Predicated region
      $region37: #{tpu_custom_call.1} parent=5 // pred_check
        %p266 = pneg %p265
      $region38: #{tpu_custom_call.1} parent=5 // pred_check_branch
        %268 = sbr.rel (%p266) target = $region40
      $region39: #{tpu_custom_call.1} parent=5 // pred_region
        // Predicated region
        $region41: #{tpu_custom_call.1} parent=39 // pred_check
          %p269 = pneg %p41
        $region42: #{tpu_custom_call.1} parent=39 // pred_check_branch
          %271 = sbr.rel (%p269) target = $region44
        $region43: #{tpu_custom_call.1} parent=39 // pred_region
          %s272 = sand.u32 %s31, 1
          %s273 = scalar_lea.sflag [#allocation3], %s272
          %s274 = sand.u32 %s31, 1
          %s275 = smul.addr %s274, 16
          %s276 = scalar_lea.vmem [#allocation2], %s275
          %s277 = smul.u32 2, %s21
          %279 = vsyncadd %s273, 0
          %s280 = smul.addr %s277, 8
          %s281 = scalar_lea.hbm %s0, %s280
          %s282 = sshll.u32 %s281, 4
          %s283 = int_to_ptr.hbm [resolvable:$true] %s282
          %s284 = sshll.u32 %s276, 4
          %s285 = int_to_ptr.vmem [resolvable:$true] %s284
          %290 = dma.hbm_to_vmem [thread:$0]  %s283, 256, %s285, %s273, 128, 128, 8
        $region44: #{tpu_custom_call.1} parent=39 // pred_fallthru
          _
      $region40: #{tpu_custom_call.1} parent=5 // pred_fallthru
        _
      %p291 = scmp.le.s32.totalorder 1, %s21
      %p292 = scmp.lt.s32.totalorder %s21, 5
      %p293 = pnand %p291, %p292
      %p294 = pneg %p293
      // Predicated region
      $region45: #{tpu_custom_call.1} parent=5 // pred_check
        _
      $region46: #{tpu_custom_call.1} parent=5 // pred_check_branch
        %296 = sbr.rel (%p293) target = $region48
      $region47: #{tpu_custom_call.1} parent=5 // pred_region
        %s297 = ssub.s32 %s21, 1
        %s298 = sand.u32 %s34, 1
        %s299 = scalar_lea.sflag [#allocation3], %s298
        %s300 = sand.u32 %s34, 1
        %s301 = smul.addr %s300, 16
        %s302 = scalar_lea.vmem [#allocation2], %s301
        // Predicated region
        $region49: #{tpu_custom_call.1} parent=47 // pred_check
          %p303 = pneg %p47
        $region50: #{tpu_custom_call.1} parent=47 // pred_check_branch
          %305 = sbr.rel (%p303) target = $region52
        $region51: #{tpu_custom_call.1} parent=47 // pred_region
          %307 = dma.done %s299, 256
        $region52: #{tpu_custom_call.1} parent=47 // pred_fallthru
          _
        // Predicated region
        $region53: #{tpu_custom_call.1} parent=47 // pred_check
          %p308 = pneg %p68
        $region54: #{tpu_custom_call.1} parent=47 // pred_check_branch
          %310 = sbr.rel (%p308) target = $region56
        $region55: #{tpu_custom_call.1} parent=47 // pred_region
          %312 = dma.done [#allocation6], 2048
        $region56: #{tpu_custom_call.1} parent=47 // pred_fallthru
          _
        // Predicated region
        $region57: #{tpu_custom_call.1} parent=47 // pred_check
          %p313 = pneg %p110
        $region58: #{tpu_custom_call.1} parent=47 // pred_check_branch
          %315 = sbr.rel (%p313) target = $region60
        $region59: #{tpu_custom_call.1} parent=47 // pred_region
          %317 = dma.done [#allocation6], 2048
        $region60: #{tpu_custom_call.1} parent=47 // pred_fallthru
          _
        // Predicated region
        $region61: #{tpu_custom_call.1} parent=47 // pred_check
          %p318 = pneg %p152
        $region62: #{tpu_custom_call.1} parent=47 // pred_check_branch
          %320 = sbr.rel (%p318) target = $region64
        $region63: #{tpu_custom_call.1} parent=47 // pred_region
          %322 = dma.done [#allocation9], 2048
        $region64: #{tpu_custom_call.1} parent=47 // pred_fallthru
          _
        %s323 = sand.u32 %s34, 1
        %s324 = scalar_lea.sflag [#allocation3], %s323
        %s325 = sand.u32 %s34, 1
        %s326 = smul.addr %s325, 16
        %s327 = scalar_lea.vmem [#allocation2], %s326
        %p328 = pneg %p47
        %p329 = pneg %p44
        %p330 = pneg %p68
        %p331 = pneg %p65
        %p332 = pneg %p89
        %p333 = pneg %p86
        %p334 = pneg %p110
        %p335 = pneg %p107
        %p336 = pneg %p131
        %p337 = pneg %p128
        %p338 = pneg %p152
        %p339 = pneg %p149
        %p340 = pneg %p173
        %p341 = pneg %p170
        %p342 = pneg %p199
        %p343 = pneg %p196
        %s344 = sand.u32 %s186, 1
        %s345 = scalar_lea.sflag [#allocation4], %s344
        %s346 = sand.u32 %s186, 1
        %s347 = smul.addr %s346, 16
        %s348 = scalar_lea.vmem [#allocation10], %s347
        %s349 = smul.u32 2, %s26
        %s350 = smul.u32 2, %s26
        %v351 = vld [vmem:[%s302] sm:$0xff]
        %v352 = vld [vmem:[%s302 + $0x8] sm:$0xff]
        %v353 = vld [vmem:[#allocation5] sm:$0xff]
        %v354 = vld [vmem:[#allocation5 + $0x8] sm:$0xff]
        %v355 = vld [vmem:[#allocation5 + $0x10] sm:$0xff]
        %v356 = vld [vmem:[#allocation5 + $0x18] sm:$0xff]
        %v357 = vld [vmem:[#allocation5 + $0x20] sm:$0xff]
        %v358 = vld [vmem:[#allocation5 + $0x28] sm:$0xff]
        %v359 = vld [vmem:[#allocation5 + $0x30] sm:$0xff]
        %v360 = vld [vmem:[#allocation5 + $0x38] sm:$0xff]
        %v361 = vld [vmem:[#allocation5 + $0x40] sm:$0xff]
        %v362 = vld [vmem:[#allocation5 + $0x48] sm:$0xff]
        %v363 = vld [vmem:[#allocation5 + $0x50] sm:$0xff]
        %v364 = vld [vmem:[#allocation5 + $0x58] sm:$0xff]
        %v365 = vld [vmem:[#allocation5 + $0x60] sm:$0xff]
        %v366 = vld [vmem:[#allocation5 + $0x68] sm:$0xff]
        %v367 = vld [vmem:[#allocation5 + $0x70] sm:$0xff]
        %v368 = vld [vmem:[#allocation5 + $0x78] sm:$0xff]
        %v369 = vld [vmem:[%s2] sm:$0x1]
        %v371 = vperm.slane %v369, 0
        %373 = vmatpush.msra.mxu0 %v368
        %374 = vmatpush.msra.mxu0 %v367
        %375 = vmatpush.msra.mxu0 %v366
        %376 = vmatpush.msra.mxu0 %v365
        %377 = vmatpush.msra.mxu0 %v364
        %378 = vmatpush.msra.mxu0 %v363
        %379 = vmatpush.msra.mxu0 %v362
        %380 = vmatpush.msra.mxu0 %v361
        %381 = vmatpush.msra.mxu0 %v360
        %382 = vmatpush.msra.mxu0 %v359
        %383 = vmatpush.msra.mxu0 %v358
        %384 = vmatpush.msra.mxu0 %v357
        %385 = vmatpush.msra.mxu0 %v356
        %386 = vmatpush.msra.mxu0 %v355
        %387 = vmatpush.msra.mxu0 %v354
        %388 = vmatpush.msra.mxu0 %v353
        %389 = vmatmul.f32.gmra.mxu0 %v351
        %v390 = vpop.f32.mrf.mxu0
        %v391 = vadd.f32 %v371, %v390
        %392 = vmatmul.f32.gmra.mxu0 %v352
        %v393 = vpop.f32.mrf.mxu0
        %v394 = vadd.f32 %v371, %v393
        %395 = vdwg.mxu0
        %v396 = vmul.f32 %v391, 0.5
        %v397 = vmul.f32 %v394, 0.5
        %v398 = vmul.f32 %v391, %v391
        %v399 = vmul.f32 %v394, %v394
        %v400 = vmul.f32 %v398, %v391
        %v401 = vmul.f32 %v399, %v394
        %v402 = vmul.f32 %v400, 0.044715
        %v403 = vmul.f32 %v401, 0.044715
        %v404 = vadd.f32 %v391, %v402
        %v405 = vadd.f32 %v394, %v403
        %v406 = vmul.f32 %v404, 0.7978846
        %v407 = vmul.f32 %v405, 0.7978846
        %v408 = vtanh.pop %v406
        %v409 = vtanh.pop %v407
        %v410 = vadd.f32 %v408, 1.0
        %v411 = vadd.f32 %v409, 1.0
        %v412 = vmul.f32 %v396, %v410
        %v413 = vmul.f32 %v397, %v411
        %v414 = vadd.f32 %v412, %v351
        %v415 = vadd.f32 %v413, %v352
        %v416 = vld [vmem:[#allocation7] sm:$0xff]
        %v417 = vld [vmem:[#allocation7 + $0x8] sm:$0xff]
        %v418 = vld [vmem:[#allocation7 + $0x10] sm:$0xff]
        %v419 = vld [vmem:[#allocation7 + $0x18] sm:$0xff]
        %v420 = vld [vmem:[#allocation7 + $0x20] sm:$0xff]
        %v421 = vld [vmem:[#allocation7 + $0x28] sm:$0xff]
        %v422 = vld [vmem:[#allocation7 + $0x30] sm:$0xff]
        %v423 = vld [vmem:[#allocation7 + $0x38] sm:$0xff]
        %v424 = vld [vmem:[#allocation7 + $0x40] sm:$0xff]
        %v425 = vld [vmem:[#allocation7 + $0x48] sm:$0xff]
        %v426 = vld [vmem:[#allocation7 + $0x50] sm:$0xff]
        %v427 = vld [vmem:[#allocation7 + $0x58] sm:$0xff]
        %v428 = vld [vmem:[#allocation7 + $0x60] sm:$0xff]
        %v429 = vld [vmem:[#allocation7 + $0x68] sm:$0xff]
        %v430 = vld [vmem:[#allocation7 + $0x70] sm:$0xff]
        %v431 = vld [vmem:[#allocation7 + $0x78] sm:$0xff]
        %v432 = vld [vmem:[%s4] sm:$0x1]
        %v434 = vperm.slane %v432, 0
        %436 = vmatpush.msra.mxu0 %v431
        %437 = vmatpush.msra.mxu0 %v430
        %438 = vmatpush.msra.mxu0 %v429
        %439 = vmatpush.msra.mxu0 %v428
        %440 = vmatpush.msra.mxu0 %v427
        %441 = vmatpush.msra.mxu0 %v426
        %442 = vmatpush.msra.mxu0 %v425
        %443 = vmatpush.msra.mxu0 %v424
        %444 = vmatpush.msra.mxu0 %v423
        %445 = vmatpush.msra.mxu0 %v422
        %446 = vmatpush.msra.mxu0 %v421
        %447 = vmatpush.msra.mxu0 %v420
        %448 = vmatpush.msra.mxu0 %v419
        %449 = vmatpush.msra.mxu0 %v418
        %450 = vmatpush.msra.mxu0 %v417
        %451 = vmatpush.msra.mxu0 %v416
        %452 = vmatmul.f32.gmra.mxu0 %v414
        %v453 = vpop.f32.mrf.mxu0
        %v454 = vadd.f32 %v434, %v453
        %455 = vmatmul.f32.gmra.mxu0 %v415
        %v456 = vpop.f32.mrf.mxu0
        %v457 = vadd.f32 %v434, %v456
        %458 = vdwg.mxu0
        %v459 = vmul.f32 %v454, 0.5
        %v460 = vmul.f32 %v457, 0.5
        %v461 = vmul.f32 %v454, %v454
        %v462 = vmul.f32 %v457, %v457
        %v463 = vmul.f32 %v461, %v454
        %v464 = vmul.f32 %v462, %v457
        %v465 = vmul.f32 %v463, 0.044715
        %v466 = vmul.f32 %v464, 0.044715
        %v467 = vadd.f32 %v454, %v465
        %v468 = vadd.f32 %v457, %v466
        %v469 = vmul.f32 %v467, 0.7978846
        %v470 = vmul.f32 %v468, 0.7978846
        %v471 = vtanh.pop %v469
        %v472 = vtanh.pop %v470
        %v473 = vadd.f32 %v471, 1.0
        %v474 = vadd.f32 %v472, 1.0
        %v475 = vmul.f32 %v459, %v473
        %v476 = vmul.f32 %v460, %v474
        %v477 = vadd.f32 %v475, %v414
        %v478 = vadd.f32 %v476, %v415
        %v479 = vld [vmem:[#allocation8] sm:$0xff]
        %v480 = vld [vmem:[#allocation8 + $0x8] sm:$0xff]
        %v481 = vld [vmem:[#allocation8 + $0x10] sm:$0xff]
        %v482 = vld [vmem:[#allocation8 + $0x18] sm:$0xff]
        %v483 = vld [vmem:[#allocation8 + $0x20] sm:$0xff]
        %v484 = vld [vmem:[#allocation8 + $0x28] sm:$0xff]
        %v485 = vld [vmem:[#allocation8 + $0x30] sm:$0xff]
        %v486 = vld [vmem:[#allocation8 + $0x38] sm:$0xff]
        %v487 = vld [vmem:[#allocation8 + $0x40] sm:$0xff]
        %v488 = vld [vmem:[#allocation8 + $0x48] sm:$0xff]
        %v489 = vld [vmem:[#allocation8 + $0x50] sm:$0xff]
        %v490 = vld [vmem:[#allocation8 + $0x58] sm:$0xff]
        %v491 = vld [vmem:[#allocation8 + $0x60] sm:$0xff]
        %v492 = vld [vmem:[#allocation8 + $0x68] sm:$0xff]
        %v493 = vld [vmem:[#allocation8 + $0x70] sm:$0xff]
        %v494 = vld [vmem:[#allocation8 + $0x78] sm:$0xff]
        %v495 = vld [vmem:[%s6] sm:$0x1]
        %v497 = vperm.slane %v495, 0
        %499 = vmatpush.msra.mxu0 %v494
        %500 = vmatpush.msra.mxu0 %v493
        %501 = vmatpush.msra.mxu0 %v492
        %502 = vmatpush.msra.mxu0 %v491
        %503 = vmatpush.msra.mxu0 %v490
        %504 = vmatpush.msra.mxu0 %v489
        %505 = vmatpush.msra.mxu0 %v488
        %506 = vmatpush.msra.mxu0 %v487
        %507 = vmatpush.msra.mxu0 %v486
        %508 = vmatpush.msra.mxu0 %v485
        %509 = vmatpush.msra.mxu0 %v484
        %510 = vmatpush.msra.mxu0 %v483
        %511 = vmatpush.msra.mxu0 %v482
        %512 = vmatpush.msra.mxu0 %v481
        %513 = vmatpush.msra.mxu0 %v480
        %514 = vmatpush.msra.mxu0 %v479
        %515 = vmatmul.f32.gmra.mxu0 %v477
        %v516 = vpop.f32.mrf.mxu0
        %v517 = vadd.f32 %v497, %v516
        %518 = vmatmul.f32.gmra.mxu0 %v478
        %v519 = vpop.f32.mrf.mxu0
        %v520 = vadd.f32 %v497, %v519
        %521 = vdwg.mxu0
        %522 = vst [vmem:[%s348] sm:$0xff] %v517
        %523 = vst [vmem:[%s348 + $0x8] sm:$0xff] %v520
        %s524 = sand.u32 %s186, 1
        %s525 = scalar_lea.sflag [#allocation4], %s524
        %s526 = sand.u32 %s186, 1
        %s527 = smul.addr %s526, 16
        %s528 = scalar_lea.vmem [#allocation10], %s527
        // Predicated region
        $region65: #{tpu_custom_call.1} parent=47 // pred_check
          %p529 = pneg %p196
        $region66: #{tpu_custom_call.1} parent=47 // pred_check_branch
          %531 = sbr.rel (%p529) target = $region68
        $region67: #{tpu_custom_call.1} parent=47 // pred_region
          %s532 = smul.u32 2, %s26
          %534 = vsyncadd %s525, 0
          %s535 = smul.addr %s532, 8
          %s536 = scalar_lea.hbm %s7, %s535
          %s537 = sshll.u32 %s528, 4
          %s538 = int_to_ptr.vmem [resolvable:$true] %s537
          %s539 = sshll.u32 %s536, 4
          %s540 = int_to_ptr.hbm [resolvable:$true] %s539
          %545 = dma.vmem_to_hbm [thread:$0]  %s538, 256, %s540, %s525, 128, 128, 8
        $region68: #{tpu_custom_call.1} parent=47 // pred_fallthru
          _
      $region48: #{tpu_custom_call.1} parent=5 // pred_fallthru
        _
      %p546 = scmp.le.s32.totalorder 2, %s21
      // Predicated region
      $region69: #{tpu_custom_call.1} parent=5 // pred_check
        %p547 = pneg %p546
      $region70: #{tpu_custom_call.1} parent=5 // pred_check_branch
        %549 = sbr.rel (%p547) target = $region72
      $region71: #{tpu_custom_call.1} parent=5 // pred_region
        %s550 = ssub.s32 %s21, 2
        // Predicated region
        $region73: #{tpu_custom_call.1} parent=71 // pred_check
          %p551 = pneg %p202
        $region74: #{tpu_custom_call.1} parent=71 // pred_check_branch
          %553 = sbr.rel (%p551) target = $region76
        $region75: #{tpu_custom_call.1} parent=71 // pred_region
          %s554 = sand.u32 %s187, 1
          %s555 = scalar_lea.sflag [#allocation4], %s554
          %s556 = sand.u32 %s187, 1
          %s557 = smul.addr %s556, 16
          %s558 = scalar_lea.vmem [#allocation10], %s557
          %560 = dma.done %s555, 256
        $region76: #{tpu_custom_call.1} parent=71 // pred_fallthru
          _
      $region72: #{tpu_custom_call.1} parent=5 // pred_fallthru
        _
    $region6: #{tpu_custom_call.1} parent=1 // loop_footer
      %s25 = sadd.s32 1, %s21
    $region7: #{tpu_custom_call.1} parent=1 // loop_footer_branch
      %20 = sbr.rel target = $region3
    $region8: #{tpu_custom_call.1} parent=1 // loop_exit
      _
    %561 = vsyncpa [#allocation3], 1
    %s562 = scalar_lea.sflag [#allocation3], 1
    %563 = vsyncpa %s562, 1
    %564 = vsyncpa [#allocation6], 1
    %565 = vsyncpa [#allocation9], 1
    %566 = vsyncpa [#allocation4], 1
    %s567 = scalar_lea.sflag [#allocation4], 1
    %568 = vsyncpa %s567, 1

</llo_original>
